<compile_context>
chip_gen: v5e
topology: v5e:2x2
jax: 0.10.0
libtpu: 0.0.40
codegen_flags: <defaults>
</compile_context>

<pallas_src>
import jax
import jax.numpy as jnp
from jax.experimental import pallas as pl
from jax.experimental.pallas import tpu as pltpu


def _round_up(v: int, m: int) -> int:
    return ((v + m - 1) // m) * m


def _mlp_kernel(x_ref, w1_ref, b1_ref, w2_ref, b2_ref, o_ref):
    # Layer 1: (tm, K) @ (K, H) -> f32 MXU accumulation; f32 bias + ReLU on VPU.
    h = jnp.dot(x_ref[...], w1_ref[...], preferred_element_type=jnp.float32)
    h = jnp.maximum(h + b1_ref[...], 0.0)
    # Layer 2: (tm, H) @ (H, A) + (1, A); cast is a no-op in the pure-f32 path.
    out = jnp.dot(h.astype(w2_ref.dtype), w2_ref[...],
                  preferred_element_type=jnp.float32)
    o_ref[...] = (out + b2_ref[...]).astype(o_ref.dtype)


def _choose_batch_tiling(B: int, tm_cap: int = 1024):
    """Pick (tm, num_steps, B_pad) with <= 7 padded rows per step and >= 2
    grid steps for non-trivial batches (v7x megacore sharding)."""
    if B <= 8:
        return B, 1, B                       # block == full array dim; no padding
    B8 = _round_up(B, 8)
    nsteps = max(2, pl.cdiv(B8, tm_cap))
    tm = _round_up(pl.cdiv(B8, nsteps), 8)
    return tm, nsteps, tm * nsteps


def model_forward(x, w1, b1, w2, b2, *, use_bf16_inputs: bool = False,
                  tm_cap: int = 1024):
    """x: (B, obs_dim) f32; w1: (obs_dim, 256); b1: (1, 256);
    w2: (256, num_actions); b2: (1, num_actions). Returns (B, num_actions) f32."""
    B, K = x.shape
    H = w1.shape[1]
    A = w2.shape[1]

    tm, nsteps, B_pad = _choose_batch_tiling(B, tm_cap)

    x_c, w1_c, w2_c = x, w1, w2
    if use_bf16_inputs:
        x_c = x_c.astype(jnp.bfloat16)
        w1_c = w1_c.astype(jnp.bfloat16)
        w2_c = w2_c.astype(jnp.bfloat16)
    if B_pad != B:
        # Only pad the batch (rows); K stays unpadded.
        x_c = jnp.zeros((B_pad, K), x_c.dtype).at[:B].set(x_c)

    itm_x = x_c.dtype.itemsize
    itm_w = w1_c.dtype.itemsize

    # Honest (unpadded-K/A) cost hint for XLA scheduling.
    flops = 2 * B_pad * (K * H + H * A)
    bytes_accessed = (x_c.size * itm_x
                      + (w1_c.size + w2_c.size) * itm_w
                      + (b1.size + b2.size) * 4
                      + B_pad * A * 4)

    # VMEM footprint: resident weights/biases + double-buffered x/out tiles
    # + f32 intermediate activations; clamp to a safe scoped-VMEM range
    # (well under v7x's 64 MiB physical VMEM).
    resident = (w1_c.size + w2_c.size) * itm_w + (b1.size + b2.size) * 4
    streamed = 2 * tm * (K * itm_x + A * 4)
    scratch = tm * H * 4
    vmem_limit = int(min(max(resident + streamed + scratch + (2 << 20), 8 << 20),
                         32 << 20))

    out = pl.pallas_call(
        _mlp_kernel,
        out_shape=jax.ShapeDtypeStruct((B_pad, A), jnp.float32),
        grid=(nsteps,),
        in_specs=[
            # x: one (tm, K) row-tile per grid step (K == full last dim -> legal).
            pl.BlockSpec((tm, K), lambda i: (i, 0)),
            # Weights / biases: constant index_map -> VMEM-resident across steps.
            pl.BlockSpec((K, H), lambda i: (0, 0)),
            pl.BlockSpec((1, H), lambda i: (0, 0)),
            pl.BlockSpec((H, A), lambda i: (0, 0)),
            pl.BlockSpec((1, A), lambda i: (0, 0)),
        ],
        # Output written unpadded in the lane dim (A == full last dim -> legal).
        out_specs=pl.BlockSpec((tm, A), lambda i: (i, 0)),
        compiler_params=pltpu.CompilerParams(
            dimension_semantics=("parallel",),   # batch axis shards across TCs
            vmem_limit_bytes=vmem_limit,
        ),
        cost_estimate=pl.CostEstimate(
            flops=flops, transcendentals=0, bytes_accessed=bytes_accessed),
    )(x_c, w1_c, b1, w2_c, b2)

    return out[:B] if B_pad != B else out


def init_params(key, obs_dim, hidden, num_actions):
    """Deterministic init mimicking torch.nn.Linear default (uniform +-1/sqrt(fan_in))."""
    k1, k2, k3, k4 = jax.random.split(key, 4)
    lim1 = 1.0 / jnp.sqrt(obs_dim)
    lim2 = 1.0 / jnp.sqrt(hidden)
    # Stored already transposed to (in, out) so the kernel computes x @ W + b.
    w1 = jax.random.uniform(k1, (obs_dim, hidden), jnp.float32, -lim1, lim1)
    b1 = jax.random.uniform(k2, (1, hidden), jnp.float32, -lim1, lim1)
    w2 = jax.random.uniform(k3, (hidden, num_actions), jnp.float32, -lim2, lim2)
    b2 = jax.random.uniform(k4, (1, num_actions), jnp.float32, -lim2, lim2)
    return w1, b1, w2, b2


if __name__ == "__main__":
    obs_dim = 32
    hidden = 256
    num_actions = 4

    key = jax.random.PRNGKey(0)
    kx, kp, kx2 = jax.random.split(key, 3)
    w1, b1, w2, b2 = init_params(kp, obs_dim, hidden, num_actions)

    # Small batch (single grid step, block == full array dims, no padding).
    x = jax.random.normal(kx, (2, obs_dim), jnp.float32)
    y = jax.block_until_ready(model_forward(x, w1, b1, w2, b2))
    ref = jnp.maximum(x @ w1 + b1, 0.0) @ w2 + b2
    assert y.shape == (2, num_actions)
    assert jnp.allclose(y, ref, atol=1e-5, rtol=1e-5)

    # Ragged batch (exercises batch padding + multi-step 'parallel' grid).
    x2 = jax.random.normal(kx2, (24, obs_dim), jnp.float32)
    y2 = jax.block_until_ready(model_forward(x2, w1, b1, w2, b2))
    ref2 = jnp.maximum(x2 @ w1 + b1, 0.0) @ w2 + b2
    assert y2.shape == (24, num_actions)
    assert jnp.allclose(y2, ref2, atol=1e-5, rtol=1e-5)

    print("KERNEL_OK")
</pallas_src>

<mosaic_0001>
module attributes {stable_mosaic.version = 11 : i64} {
  func.func @_mlp_kernel(%arg0: i32, %arg1: memref<2x32xf32, #tpu.memory_space<vmem>>, %arg2: memref<32x256xf32, #tpu.memory_space<vmem>>, %arg3: memref<1x256xf32, #tpu.memory_space<vmem>>, %arg4: memref<256x4xf32, #tpu.memory_space<vmem>>, %arg5: memref<1x4xf32, #tpu.memory_space<vmem>>, %arg6: memref<2x4xf32, #tpu.memory_space<vmem>>) attributes {dimension_semantics = [#tpu.dimension_semantics<parallel>], iteration_bounds = array<i64: 1>, scalar_prefetch = 0 : i64, scratch_operands = 0 : i64, tpu.core_type = #tpu.core_type<tc>, window_params = [{transform_indices = @transform_0, window_bounds = array<i64: 2, 32>}, {pipeline_mode = #tpu.pipeline_mode<synchronous>, transform_indices = @transform_1, window_bounds = array<i64: 32, 256>}, {pipeline_mode = #tpu.pipeline_mode<synchronous>, transform_indices = @transform_2, window_bounds = array<i64: 1, 256>}, {pipeline_mode = #tpu.pipeline_mode<synchronous>, transform_indices = @transform_3, window_bounds = array<i64: 256, 4>}, {pipeline_mode = #tpu.pipeline_mode<synchronous>, transform_indices = @transform_4, window_bounds = array<i64: 1, 4>}, {transform_indices = @transform_5, window_bounds = array<i64: 2, 4>}]} {
    %c0 = arith.constant 0 : index
    %c0_0 = arith.constant 0 : index
    %0 = vector.load %arg1[%c0, %c0_0] : memref<2x32xf32, #tpu.memory_space<vmem>>, vector<2x32xf32>
    %c0_1 = arith.constant 0 : index
    %c0_2 = arith.constant 0 : index
    %1 = vector.load %arg2[%c0_1, %c0_2] : memref<32x256xf32, #tpu.memory_space<vmem>>, vector<32x256xf32>
    %cst = arith.constant dense<0.000000e+00> : vector<2x256xf32>
    %2 = tpu.matmul %0, %1, %cst {dimension_numbers = #tpu.dot_dimension_numbers<[1], [0], [0], [1], [0, 0, 1, 1], [], []>} : vector<2x32xf32>, vector<32x256xf32>, vector<2x256xf32> -> vector<2x256xf32>
    %c0_3 = arith.constant 0 : index
    %c0_4 = arith.constant 0 : index
    %3 = vector.load %arg3[%c0_3, %c0_4] : memref<1x256xf32, #tpu.memory_space<vmem>>, vector<1x256xf32>
    %4 = vector.broadcast %3 : vector<1x256xf32> to vector<2x256xf32>
    %5 = arith.addf %2, %4 : vector<2x256xf32>
    %cst_5 = arith.constant 0.000000e+00 : f32
    %6 = vector.broadcast %cst_5 : f32 to vector<2x256xf32>
    %7 = arith.maximumf %5, %6 : vector<2x256xf32>
    %c0_6 = arith.constant 0 : index
    %c0_7 = arith.constant 0 : index
    %8 = vector.load %arg4[%c0_6, %c0_7] : memref<256x4xf32, #tpu.memory_space<vmem>>, vector<256x4xf32>
    %cst_8 = arith.constant dense<0.000000e+00> : vector<2x4xf32>
    %9 = tpu.matmul %7, %8, %cst_8 {dimension_numbers = #tpu.dot_dimension_numbers<[1], [0], [0], [1], [0, 0, 1, 1], [], []>} : vector<2x256xf32>, vector<256x4xf32>, vector<2x4xf32> -> vector<2x4xf32>
    %c0_9 = arith.constant 0 : index
    %c0_10 = arith.constant 0 : index
    %10 = vector.load %arg5[%c0_9, %c0_10] : memref<1x4xf32, #tpu.memory_space<vmem>>, vector<1x4xf32>
    %11 = vector.broadcast %10 : vector<1x4xf32> to vector<2x4xf32>
    %12 = arith.addf %9, %11 : vector<2x4xf32>
    %c0_11 = arith.constant 0 : index
    %c0_12 = arith.constant 0 : index
    %13 = vector.load %arg6[%c0_11, %c0_12] : memref<2x4xf32, #tpu.memory_space<vmem>>, vector<2x4xf32>
    tpu.vector_store %arg6[%c0_11, %c0_12], %12 {strides = array<i32>} : memref<2x4xf32, #tpu.memory_space<vmem>>, vector<2x4xf32>,
    return
  }
  func.func @transform_0(%arg0: i32) -> (i32, i32) {
    %c0_i32 = arith.constant 0 : i32
    %c0_i32_0 = arith.constant 0 : i32
    return %arg0, %c0_i32 : i32, i32
  }
  func.func @transform_1(%arg0: i32) -> (i32, i32) {
    %c0_i32 = arith.constant 0 : i32
    %c0_i32_0 = arith.constant 0 : i32
    %c0_i32_1 = arith.constant 0 : i32
    return %c0_i32, %c0_i32_0 : i32, i32
  }
  func.func @transform_2(%arg0: i32) -> (i32, i32) {
    %c0_i32 = arith.constant 0 : i32
    %c0_i32_0 = arith.constant 0 : i32
    %c0_i32_1 = arith.constant 0 : i32
    return %c0_i32, %c0_i32_0 : i32, i32
  }
  func.func @transform_3(%arg0: i32) -> (i32, i32) {
    %c0_i32 = arith.constant 0 : i32
    %c0_i32_0 = arith.constant 0 : i32
    %c0_i32_1 = arith.constant 0 : i32
    return %c0_i32, %c0_i32_0 : i32, i32
  }
  func.func @transform_4(%arg0: i32) -> (i32, i32) {
    %c0_i32 = arith.constant 0 : i32
    %c0_i32_0 = arith.constant 0 : i32
    %c0_i32_1 = arith.constant 0 : i32
    return %c0_i32, %c0_i32_0 : i32, i32
  }
  func.func @transform_5(%arg0: i32) -> (i32, i32) {
    %c0_i32 = arith.constant 0 : i32
    %c0_i32_0 = arith.constant 0 : i32
    return %arg0, %c0_i32 : i32, i32
  }
}

</mosaic_0001>

<llo_original>
// kernel: tpu_custom_call.1
$region0: #{tpu_custom_call.1}
  #allocation0 [shape = 'u32[]', space=smem, size = 0x4, offset = 0x4, fixed_abs, tag = 'smem constant byte address 0x4 - core index']
  #allocation1 [shape = 'u32[72,128]{1,0:T(1,128)}', space=vmem, size = 0x9000, scoped, tag = 'internal scratch']
  %s0 = inlined_call_operand.vmem [shape: f32[2,32], index: 0, kind: input, shape index: {}]
  %s1 = inlined_call_operand.vmem [shape: f32[32,256], index: 1, kind: input, shape index: {}]
  %s2 = inlined_call_operand.vmem [shape: f32[1,256], index: 2, kind: input, shape index: {}]
  %s3 = inlined_call_operand.vmem [shape: f32[256,4], index: 3, kind: input, shape index: {}]
  %s4 = inlined_call_operand.vmem [shape: f32[1,4], index: 4, kind: input, shape index: {}]
  %s5 = inlined_call_operand.hbm [shape: f32[2,4], index: 5, kind: output, shape index: {}]
  %s6 = sld [smem:[#allocation0]]
  $region30: #{tpu_custom_call.1} parent=0
    _
  %s8 = ssub.s32 1, %s6
  %s9 = scalar_select 0, %s8, %s6
  $region1: #{tpu_custom_call.1} parent=0
    #allocation2 [shape = 'u8[1024]{0}', space=vmem, size = 0x400, scoped, tag = 'output window, operand 0, single buffered']
    #allocation3 [shape = 's32[1]{0}', space=sflag, size = 0x4, scoped, tag = 'scoped memory for tpu_custom_call.1']
    %10 = vsyncpa [#allocation3], 0
    // Predicated region
    $region2: #{tpu_custom_call.1} parent=1 // pred_check
      _
    $region3: #{tpu_custom_call.1} parent=1 // pred_check_branch
      %12 = sbr.rel (0) target = $region5
    $region4: #{tpu_custom_call.1} parent=1 // pred_region
      _
    $region5: #{tpu_custom_call.1} parent=1 // pred_fallthru
      _
    // Predicated region
    $region6: #{tpu_custom_call.1} parent=1 // pred_check
      _
    $region7: #{tpu_custom_call.1} parent=1 // pred_check_branch
      %14 = sbr.rel (0) target = $region9
    $region8: #{tpu_custom_call.1} parent=1 // pred_region
      _
    $region9: #{tpu_custom_call.1} parent=1 // pred_fallthru
      _
    // Predicated region
    $region10: #{tpu_custom_call.1} parent=1 // pred_check
      _
    $region11: #{tpu_custom_call.1} parent=1 // pred_check_branch
      %16 = sbr.rel (0) target = $region13
    $region12: #{tpu_custom_call.1} parent=1 // pred_region
      _
    $region13: #{tpu_custom_call.1} parent=1 // pred_fallthru
      _
    // Predicated region
    $region14: #{tpu_custom_call.1} parent=1 // pred_check
      _
    $region15: #{tpu_custom_call.1} parent=1 // pred_check_branch
      %18 = sbr.rel (0) target = $region17
    $region16: #{tpu_custom_call.1} parent=1 // pred_region
      _
    $region17: #{tpu_custom_call.1} parent=1 // pred_fallthru
      _
    // Predicated region
    $region18: #{tpu_custom_call.1} parent=1 // pred_check
      _
    $region19: #{tpu_custom_call.1} parent=1 // pred_check_branch
      %20 = sbr.rel (0) target = $region21
    $region20: #{tpu_custom_call.1} parent=1 // pred_region
      _
    $region21: #{tpu_custom_call.1} parent=1 // pred_fallthru
      _
    %v21 = vld [vmem:[%s0] sm:$0x3]
    %v22 = vld [vmem:[%s1] sm:$0xff]
    %v23 = vld [vmem:[%s1 + $0x8] sm:$0xff]
    %v24 = vld [vmem:[%s1 + $0x10] sm:$0xff]
    %v25 = vld [vmem:[%s1 + $0x18] sm:$0xff]
    %v26 = vld [vmem:[%s1 + $0x20] sm:$0xff]
    %v27 = vld [vmem:[%s1 + $0x28] sm:$0xff]
    %v28 = vld [vmem:[%s1 + $0x30] sm:$0xff]
    %v29 = vld [vmem:[%s1 + $0x38] sm:$0xff]
    %v30 = vld [vmem:[%s2] sm:$0x3]
    %v32 = vperm.slane %v30, 0
    %v33 = vperm.slane %v30, 1
    %vm36 = vcmask 261120
    %v38 = vsel %vm36, %v21, 0
    %40 = vmatpush.msra.mxu0 0.0
    %41 = vmatpush.msra.mxu0 0.0
    %42 = vmatpush.msra.mxu0 0.0
    %43 = vmatpush.msra.mxu0 0.0
    %44 = vmatpush.msra.mxu0 0.0
    %45 = vmatpush.msra.mxu0 0.0
    %46 = vmatpush.msra.mxu0 0.0
    %47 = vmatpush.msra.mxu0 0.0
    %48 = vmatpush.msra.mxu0 0.0
    %49 = vmatpush.msra.mxu0 0.0
    %50 = vmatpush.msra.mxu0 0.0
    %51 = vmatpush.msra.mxu0 0.0
    %52 = vmatpush.msra.mxu0 %v28
    %53 = vmatpush.msra.mxu0 %v26
    %54 = vmatpush.msra.mxu0 %v24
    %55 = vmatpush.msra.mxu0 %v22
    %56 = vmatmul.f32.gmra.mxu0 %v38
    %v57 = vpop.f32.mrf.mxu0
    %v58 = vadd.f32 %v32, %v57
    %59 = vdwg.mxu0
    %60 = vmatpush.msra.mxu0 0.0
    %61 = vmatpush.msra.mxu0 0.0
    %62 = vmatpush.msra.mxu0 0.0
    %63 = vmatpush.msra.mxu0 0.0
    %64 = vmatpush.msra.mxu0 0.0
    %65 = vmatpush.msra.mxu0 0.0
    %66 = vmatpush.msra.mxu0 0.0
    %67 = vmatpush.msra.mxu0 0.0
    %68 = vmatpush.msra.mxu0 0.0
    %69 = vmatpush.msra.mxu0 0.0
    %70 = vmatpush.msra.mxu0 0.0
    %71 = vmatpush.msra.mxu0 0.0
    %72 = vmatpush.msra.mxu0 %v29
    %73 = vmatpush.msra.mxu0 %v27
    %74 = vmatpush.msra.mxu0 %v25
    %75 = vmatpush.msra.mxu0 %v23
    %76 = vmatmul.f32.gmra.mxu0 %v38
    %v77 = vpop.f32.mrf.mxu0
    %v78 = vadd.f32 %v33, %v77
    %79 = vdwg.mxu0
    %v80 = vmax.f32 %v58, 0.0
    %v81 = vmax.f32 %v78, 0.0
    %v82 = vld [vmem:[%s3] sm:$0xff]
    %v83 = vld [vmem:[%s3 + $0x8] sm:$0xff]
    %v84 = vld [vmem:[%s3 + $0x10] sm:$0xff]
    %v85 = vld [vmem:[%s3 + $0x18] sm:$0xff]
    %v86 = vld [vmem:[%s3 + $0x20] sm:$0xff]
    %v87 = vld [vmem:[%s3 + $0x28] sm:$0xff]
    %v88 = vld [vmem:[%s3 + $0x30] sm:$0xff]
    %v89 = vld [vmem:[%s3 + $0x38] sm:$0xff]
    %v90 = vld [vmem:[%s3 + $0x40] sm:$0xff]
    %v91 = vld [vmem:[%s3 + $0x48] sm:$0xff]
    %v92 = vld [vmem:[%s3 + $0x50] sm:$0xff]
    %v93 = vld [vmem:[%s3 + $0x58] sm:$0xff]
    %v94 = vld [vmem:[%s3 + $0x60] sm:$0xff]
    %v95 = vld [vmem:[%s3 + $0x68] sm:$0xff]
    %v96 = vld [vmem:[%s3 + $0x70] sm:$0xff]
    %v97 = vld [vmem:[%s3 + $0x78] sm:$0xff]
    %v98 = vld [vmem:[%s3 + $0x80] sm:$0xff]
    %v99 = vld [vmem:[%s3 + $0x88] sm:$0xff]
    %v100 = vld [vmem:[%s3 + $0x90] sm:$0xff]
    %v101 = vld [vmem:[%s3 + $0x98] sm:$0xff]
    %v102 = vld [vmem:[%s3 + $0xa0] sm:$0xff]
    %v103 = vld [vmem:[%s3 + $0xa8] sm:$0xff]
    %v104 = vld [vmem:[%s3 + $0xb0] sm:$0xff]
    %v105 = vld [vmem:[%s3 + $0xb8] sm:$0xff]
    %v106 = vld [vmem:[%s3 + $0xc0] sm:$0xff]
    %v107 = vld [vmem:[%s3 + $0xc8] sm:$0xff]
    %v108 = vld [vmem:[%s3 + $0xd0] sm:$0xff]
    %v109 = vld [vmem:[%s3 + $0xd8] sm:$0xff]
    %v110 = vld [vmem:[%s3 + $0xe0] sm:$0xff]
    %v111 = vld [vmem:[%s3 + $0xe8] sm:$0xff]
    %v112 = vld [vmem:[%s3 + $0xf0] sm:$0xff]
    %v113 = vld [vmem:[%s3 + $0xf8] sm:$0xff]
    %v114 = vld [vmem:[%s4] sm:$0x1]
    %v116 = vperm.slane %v114, 0
    %118 = vmatpush.msra.mxu0 %v97
    %119 = vmatpush.msra.mxu0 %v96
    %120 = vmatpush.msra.mxu0 %v95
    %121 = vmatpush.msra.mxu0 %v94
    %122 = vmatpush.msra.mxu0 %v93
    %123 = vmatpush.msra.mxu0 %v92
    %124 = vmatpush.msra.mxu0 %v91
    %125 = vmatpush.msra.mxu0 %v90
    %126 = vmatpush.msra.mxu0 %v89
    %127 = vmatpush.msra.mxu0 %v88
    %128 = vmatpush.msra.mxu0 %v87
    %129 = vmatpush.msra.mxu0 %v86
    %130 = vmatpush.msra.mxu0 %v85
    %131 = vmatpush.msra.mxu0 %v84
    %132 = vmatpush.msra.mxu0 %v83
    %133 = vmatpush.msra.mxu0 %v82
    %134 = vmatmul.f32.gmra.mxu0 %v80
    %v135 = vpop.f32.mrf.mxu0
    %v136 = vadd.f32 %v116, %v135
    %137 = vdwg.mxu0
    %138 = vmatpush.msra.mxu0 %v113
    %139 = vmatpush.msra.mxu0 %v112
    %140 = vmatpush.msra.mxu0 %v111
    %141 = vmatpush.msra.mxu0 %v110
    %142 = vmatpush.msra.mxu0 %v109
    %143 = vmatpush.msra.mxu0 %v108
    %144 = vmatpush.msra.mxu0 %v107
    %145 = vmatpush.msra.mxu0 %v106
    %146 = vmatpush.msra.mxu0 %v105
    %147 = vmatpush.msra.mxu0 %v104
    %148 = vmatpush.msra.mxu0 %v103
    %149 = vmatpush.msra.mxu0 %v102
    %150 = vmatpush.msra.mxu0 %v101
    %151 = vmatpush.msra.mxu0 %v100
    %152 = vmatpush.msra.mxu0 %v99
    %153 = vmatpush.msra.mxu0 %v98
    %154 = vmatmul.f32.gmra.mxu0 %v81
    %v155 = vpop.f32.mrf.mxu0
    %v156 = vadd.f32 %v136, %v155
    %157 = vdwg.mxu0
    %vm158 = vcmask 25600
    %159 = vst.msk [vmem:[#allocation2] sm:$0x3] %vm158, %v156
    // Predicated region
    $region22: #{tpu_custom_call.1} parent=1 // pred_check
      _
    $region23: #{tpu_custom_call.1} parent=1 // pred_check_branch
      %161 = sbr.rel (0) target = $region25
    $region24: #{tpu_custom_call.1} parent=1 // pred_region
      %163 = vsyncadd [#allocation3], 0
      %s165 = sshll.u32 [#allocation2], 4
      %s166 = int_to_ptr.vmem [resolvable:$true] %s165
      %s167 = sshll.u32 %s5, 4
      %s168 = int_to_ptr.hbm [resolvable:$true] %s167
      %170 = dma.vmem_to_hbm [thread:$0]  %s166, 32, %s168, [#allocation3]
    $region25: #{tpu_custom_call.1} parent=1 // pred_fallthru
      _
    // Predicated region
    $region26: #{tpu_custom_call.1} parent=1 // pred_check
      _
    $region27: #{tpu_custom_call.1} parent=1 // pred_check_branch
      %172 = sbr.rel (0) target = $region29
    $region28: #{tpu_custom_call.1} parent=1 // pred_region
      %174 = dma.done [#allocation3], 32
    $region29: #{tpu_custom_call.1} parent=1 // pred_fallthru
      _
    %175 = vsyncpa [#allocation3], 1

</llo_original>
